<compile_context>
chip_gen: v5e
topology: v5e:2x2
jax: 0.10.0
libtpu: 0.0.40
codegen_flags: <defaults>
</compile_context>

<pallas_src>
import functools

import jax
import jax.numpy as jnp
from jax.experimental import pallas as pl
from jax.experimental.pallas import tpu as pltpu


_NEG_FILL = -1e30  # class-dim pad value: exp(pad - row_max) == 0, LSE stays exact


def _round_up(x: int, m: int) -> int:
    return (x + m - 1) // m * m


def _wce_kernel(w_ref, logits_ref, tgt_ref, o_ref, loss_acc, cnt_acc):
    """One (attribute, batch-tile) grid step.

    w_ref:      (A,) f32 in SMEM        -- per-attribute weights
    logits_ref: (tile_b, C_pad) float   -- lane-aligned logits block
    tgt_ref:    (tile_b, 1) int32       -- class index, -1 => ignored
    o_ref:      (1, 1) f32              -- weighted mean CE for this attribute
    loss_acc / cnt_acc: (1, 1) f32 VMEM scratch accumulated over batch tiles.
    """
    a = pl.program_id(0)
    b = pl.program_id(1)

    @pl.when(b == 0)
    def _():
        loss_acc[...] = jnp.zeros_like(loss_acc)
        cnt_acc[...] = jnp.zeros_like(cnt_acc)

    logits = logits_ref[...].astype(jnp.float32)             # f32 compute (v5e has no bf16 VPU/EUP)
    tgt = tgt_ref[...]                                        # (tile_b, 1) int32

    # Numerically stable log-sum-exp; reuse `shifted` for both the exp-sum and
    # the one-hot target gather (saves one full VPU pass over the block).
    row_max = jnp.max(logits, axis=-1, keepdims=True)         # (tile_b, 1)
    shifted = logits - row_max                                # (tile_b, C_pad)
    lse = jnp.log(jnp.sum(jnp.exp(shifted), axis=-1, keepdims=True))
    col = jax.lax.broadcasted_iota(jnp.int32, shifted.shape, 1)
    tgt_shifted = jnp.sum(jnp.where(col == tgt, shifted, 0.0),
                          axis=-1, keepdims=True)
    per_row = lse - tgt_shifted                               # (tile_b, 1) NLL per sample

    # ignore_index == -1 (also masks rows added by batch padding).
    # TODO(synk): out-of-range targets (>= num_classes) are silently ignored in
    # the gather; the original module only logs a diagnostic for them.
    valid = tgt != jnp.int32(-1)
    loss_acc[...] += jnp.sum(jnp.where(valid, per_row, 0.0), keepdims=True)
    cnt_acc[...] += jnp.sum(valid.astype(jnp.float32), keepdims=True)

    @pl.when(b == pl.num_programs(1) - 1)
    def _():
        # mean over non-ignored rows (NaN if every row ignored, matching torch),
        # scaled by this attribute's weight.
        o_ref[...] = w_ref[a] * loss_acc[...] / cnt_acc[...]


def _fused_weighted_ce(logits_tuple, targets, weights):
    """Returns (per_attr_weighted_loss (A,), total_loss scalar)."""
    A = len(logits_tuple)
    B = logits_tuple[0].shape[0]
    dt = jnp.result_type(*logits_tuple)
    itemsize = jnp.dtype(dt).itemsize

    # Class dim -> 128-wide lane axis.
    C_pad = max(128, _round_up(max(x.shape[1] for x in logits_tuple), 128))

    # Batch tile: multiple of 8 sublanes, per-block footprint capped (~2 MiB)
    # so the double-buffered pipeline + f32 temporaries stay comfortably inside
    # the scoped VMEM limit on every generation (incl. v7x's 64 MiB VMEM).
    budget_rows = max(8, (2 * 1024 * 1024) // (C_pad * itemsize))
    tile_b = max(8, min(512, (budget_rows // 8) * 8))
    tile_b = min(tile_b, _round_up(B, 8))
    B_pad = _round_up(B, tile_b)

    # Pad + stack all attributes into one (A, B_pad, C_pad) slab.  Padded class
    # lanes get -1e30 (exact LSE); padded batch rows get target -1 (masked).
    stacked = jnp.stack([
        jnp.pad(x.astype(dt),
                ((0, B_pad - B), (0, C_pad - x.shape[1])),
                constant_values=_NEG_FILL)
        for x in logits_tuple])                               # (A, B_pad, C_pad)

    tgt = jnp.transpose(targets.astype(jnp.int32))            # (A, B)
    tgt = jnp.pad(tgt, ((0, 0), (0, B_pad - B)), constant_values=-1)
    tgt = tgt.reshape(A, B_pad, 1)                            # (A, B_pad, 1)

    grid = (A, B_pad // tile_b)

    out = pl.pallas_call(
        _wce_kernel,
        out_shape=jax.ShapeDtypeStruct((A, 1, 1), jnp.float32),
        grid_spec=pltpu.PrefetchScalarGridSpec(
            num_scalar_prefetch=0,
            grid=grid,
            in_specs=[
                # per-attribute weights: whole array resident in SMEM
                pl.BlockSpec(memory_space=pltpu.MemorySpace.SMEM),
                pl.BlockSpec((None, tile_b, C_pad), lambda a, b: (a, b, 0)),
                pl.BlockSpec((None, tile_b, 1), lambda a, b: (a, b, 0)),
            ],
            out_specs=pl.BlockSpec((None, 1, 1), lambda a, b: (a, 0, 0)),
            scratch_shapes=[pltpu.VMEM((1, 1), jnp.float32),   # loss_sum acc
                            pltpu.VMEM((1, 1), jnp.float32)],  # valid-count acc
        ),
        compiler_params=pltpu.CompilerParams(
            # attribute axis: independent per-a output -> megacore-parallel on
            # v7x; batch axis carries the accumulator -> arbitrary.
            dimension_semantics=("parallel", "arbitrary")),
        cost_estimate=pl.CostEstimate(
            flops=5 * A * B_pad * C_pad,
            transcendentals=A * B_pad * C_pad,
            bytes_accessed=A * B_pad * (C_pad * itemsize + 4) + 8 * A),
    )(weights.astype(jnp.float32), stacked, tgt)

    per_attr = out[:, 0, 0]                                    # (A,) weighted per-attribute losses
    return per_attr, jnp.sum(per_attr)


_fused_weighted_ce_jit = jax.jit(_fused_weighted_ce)


class WeightedCrossEntropyLoss:
    """JAX/Pallas port of the PyTorch WeightedCrossEntropyLoss module.

    Returns (total_loss, losses_dict).  losses_dict holds 0-d device arrays
    (weighted per-attribute losses) instead of Python floats so the forward
    pass stays fully asynchronous; call jax.device_get(...) once if host
    floats are needed.
    """

    def __init__(self, attribute_weights=None):
        self.attribute_weights = attribute_weights if attribute_weights else {}

    def __call__(self, outputs, targets):
        # TODO(synk): the original module only *logs* NaN/Inf and out-of-range
        # target diagnostics (no effect on the returned value); skipped here.
        names = list(outputs.keys())
        weights = jnp.asarray(
            [float(self.attribute_weights.get(n, 1.0)) for n in names],
            dtype=jnp.float32)
        logits_tuple = tuple(outputs[n] for n in names)
        per_attr, total = _fused_weighted_ce_jit(logits_tuple, targets, weights)
        losses_dict = {n: per_attr[i] for i, n in enumerate(names)}
        return total, losses_dict


if __name__ == "__main__":
    key = jax.random.PRNGKey(0)
    B = 8
    # synthetic multi-attribute head: name -> num_classes
    attr_classes = {"color": 6, "pattern": 4, "sleeve": 3}
    attribute_weights = {"color": 1.0, "pattern": 2.0, "sleeve": 0.5}

    keys = jax.random.split(key, 2 * len(attr_classes))
    outputs = {}
    target_cols = []
    for j, (name, c) in enumerate(attr_classes.items()):
        outputs[name] = jax.random.normal(keys[2 * j], (B, c), dtype=jnp.float32)
        t = jax.random.randint(keys[2 * j + 1], (B,), 0, c, dtype=jnp.int32)
        t = t.at[j % B].set(-1)  # sprinkle some ignore_index=-1 entries
        target_cols.append(t)
    targets = jnp.stack(target_cols, axis=1)  # (B, num_attrs) int32

    criterion = WeightedCrossEntropyLoss(attribute_weights)
    total_loss, losses_dict = criterion(outputs, targets)
    total_loss = jax.block_until_ready(total_loss)

    # pure-jnp reference (log_softmax + masked mean), single host sync at the end.
    ref_total = jnp.float32(0.0)
    for i, (name, logits) in enumerate(outputs.items()):
        t = targets[:, i]
        valid = t != -1
        logp = jax.nn.log_softmax(logits.astype(jnp.float32), axis=-1)
        nll = -jnp.take_along_axis(logp, jnp.where(valid, t, 0)[:, None], axis=-1)[:, 0]
        attr_loss = jnp.sum(jnp.where(valid, nll, 0.0)) / jnp.sum(valid.astype(jnp.float32))
        ref_total = ref_total + attribute_weights.get(name, 1.0) * attr_loss
    assert abs(float(total_loss) - float(ref_total)) < 1e-4, (float(total_loss), float(ref_total))

    print("KERNEL_OK")
</pallas_src>

<mosaic_0001>
module attributes {stable_mosaic.version = 11 : i64} {
  func.func @_wce_kernel(%arg0: i32, %arg1: i32, %arg2: memref<3xf32, #tpu.memory_space<smem>>, %arg3: memref<1x8x128xf32, #tpu.memory_space<vmem>>, %arg4: memref<1x8x1xi32, #tpu.memory_space<vmem>>, %arg5: memref<1x1x1xf32, #tpu.memory_space<vmem>>, %arg6: memref<1x1xf32, #tpu.memory_space<vmem>>, %arg7: memref<1x1xf32, #tpu.memory_space<vmem>>) attributes {dimension_semantics = [#tpu.dimension_semantics<parallel>, #tpu.dimension_semantics<arbitrary>], iteration_bounds = array<i64: 3, 1>, scalar_prefetch = 0 : i64, scratch_operands = 2 : i64, tpu.core_type = #tpu.core_type<tc>, window_params = [{transform_indices = @transform_0, window_bounds = array<i64: 3>}, {transform_indices = @transform_1, window_bounds = array<i64: 1, 8, 128>}, {transform_indices = @transform_2, window_bounds = array<i64: 1, 8, 1>}, {transform_indices = @transform_3, window_bounds = array<i64: 1, 1, 1>}]} {
    %c0_i32 = arith.constant 0 : i32
    %0 = arith.cmpi eq, %arg1, %c0_i32 : i32
    %1 = arith.extui %0 : i1 to i32
    %c0_i32_0 = arith.constant 0 : i32
    %2 = arith.cmpi ne, %1, %c0_i32_0 : i32
    scf.if %2 {
      %cst_22 = arith.constant 0.000000e+00 : f32
      %48 = vector.broadcast %cst_22 : f32 to vector<1x1xf32>
      %c0_23 = arith.constant 0 : index
      %c0_24 = arith.constant 0 : index
      %49 = vector.load %arg6[%c0_23, %c0_24] : memref<1x1xf32, #tpu.memory_space<vmem>>, vector<1x1xf32>
      tpu.vector_store %arg6[%c0_23, %c0_24], %48 {strides = array<i32>} : memref<1x1xf32, #tpu.memory_space<vmem>>, vector<1x1xf32>,
      %cst_25 = arith.constant 0.000000e+00 : f32
      %50 = vector.broadcast %cst_25 : f32 to vector<1x1xf32>
      %c0_26 = arith.constant 0 : index
      %c0_27 = arith.constant 0 : index
      %51 = vector.load %arg7[%c0_26, %c0_27] : memref<1x1xf32, #tpu.memory_space<vmem>>, vector<1x1xf32>
      tpu.vector_store %arg7[%c0_26, %c0_27], %50 {strides = array<i32>} : memref<1x1xf32, #tpu.memory_space<vmem>>, vector<1x1xf32>,
    } else {
    }
    %c0 = arith.constant 0 : index
    %c0_1 = arith.constant 0 : index
    %c0_2 = arith.constant 0 : index
    %3 = vector.load %arg3[%c0, %c0_1, %c0_2] : memref<1x8x128xf32, #tpu.memory_space<vmem>>, vector<1x8x128xf32>
    %4 = vector.shape_cast %3 : vector<1x8x128xf32> to vector<8x128xf32>
    %c0_3 = arith.constant 0 : index
    %c0_4 = arith.constant 0 : index
    %c0_5 = arith.constant 0 : index
    %5 = vector.load %arg4[%c0_3, %c0_4, %c0_5] : memref<1x8x1xi32, #tpu.memory_space<vmem>>, vector<1x8x1xi32>
    %6 = vector.shape_cast %5 : vector<1x8x1xi32> to vector<8x1xi32>
    %cst = arith.constant dense<0xFF800000> : vector<8xf32>
    %7 = vector.multi_reduction <maximumf>, %4, %cst [1] : vector<8x128xf32> to vector<8xf32>
    %8 = vector.shape_cast %7 : vector<8xf32> to vector<8x1xf32>
    %9 = vector.broadcast %8 : vector<8x1xf32> to vector<8x128xf32>
    %10 = arith.subf %4, %9 : vector<8x128xf32>
    %11 = math.exp %10 : vector<8x128xf32>
    %cst_6 = arith.constant dense<0.000000e+00> : vector<8xf32>
    %12 = vector.multi_reduction <add>, %11, %cst_6 [1] : vector<8x128xf32> to vector<8xf32>
    %13 = vector.shape_cast %12 : vector<8xf32> to vector<8x1xf32>
    %14 = math.log %13 : vector<8x1xf32>
    %15 = tpu.iota {dimensions = array<i32: 1>} : vector<8x128xi32>
    %16 = vector.broadcast %6 : vector<8x1xi32> to vector<8x128xi32>
    %17 = arith.cmpi eq, %15, %16 : vector<8x128xi32>
    %cst_7 = arith.constant 0.000000e+00 : f32
    %18 = vector.broadcast %cst_7 : f32 to vector<8x128xf32>
    %19 = arith.select %17, %10, %18 : vector<8x128xi1>, vector<8x128xf32>
    %cst_8 = arith.constant dense<0.000000e+00> : vector<8xf32>
    %20 = vector.multi_reduction <add>, %19, %cst_8 [1] : vector<8x128xf32> to vector<8xf32>
    %21 = vector.shape_cast %20 : vector<8xf32> to vector<8x1xf32>
    %22 = arith.subf %14, %21 : vector<8x1xf32>
    %c-1_i32 = arith.constant -1 : i32
    %23 = vector.broadcast %c-1_i32 : i32 to vector<8x1xi32>
    %24 = arith.cmpi ne, %6, %23 : vector<8x1xi32>
    %c0_9 = arith.constant 0 : index
    %c0_10 = arith.constant 0 : index
    %25 = vector.load %arg6[%c0_9, %c0_10] : memref<1x1xf32, #tpu.memory_space<vmem>>, vector<1x1xf32>
    %cst_11 = arith.constant 0.000000e+00 : f32
    %26 = vector.broadcast %cst_11 : f32 to vector<8x1xf32>
    %27 = arith.select %24, %22, %26 : vector<8x1xi1>, vector<8x1xf32>
    %28 = vector.shape_cast %27 : vector<8x1xf32> to vector<1x8x1xf32>
    %cst_12 = arith.constant dense<0.000000e+00> : vector<1xf32>
    %29 = vector.multi_reduction <add>, %28, %cst_12 [1, 2] : vector<1x8x1xf32> to vector<1xf32>
    %30 = vector.shape_cast %29 : vector<1xf32> to vector<1x1x1xf32>
    %31 = vector.extract %30[0, 0, 0] : f32 from vector<1x1x1xf32>
    %32 = vector.broadcast %31 : f32 to vector<1x1xf32>
    %33 = arith.addf %25, %32 : vector<1x1xf32>
    %c0_13 = arith.constant 0 : index
    %c0_14 = arith.constant 0 : index
    %34 = vector.load %arg6[%c0_13, %c0_14] : memref<1x1xf32, #tpu.memory_space<vmem>>, vector<1x1xf32>
    tpu.vector_store %arg6[%c0_13, %c0_14], %33 {strides = array<i32>} : memref<1x1xf32, #tpu.memory_space<vmem>>, vector<1x1xf32>,
    %c0_15 = arith.constant 0 : index
    %c0_16 = arith.constant 0 : index
    %35 = vector.load %arg7[%c0_15, %c0_16] : memref<1x1xf32, #tpu.memory_space<vmem>>, vector<1x1xf32>
    %36 = arith.extui %24 : vector<8x1xi1> to vector<8x1xi32>
    %37 = arith.sitofp %36 : vector<8x1xi32> to vector<8x1xf32>
    %38 = vector.shape_cast %37 : vector<8x1xf32> to vector<1x8x1xf32>
    %cst_17 = arith.constant dense<0.000000e+00> : vector<1xf32>
    %39 = vector.multi_reduction <add>, %38, %cst_17 [1, 2] : vector<1x8x1xf32> to vector<1xf32>
    %40 = vector.shape_cast %39 : vector<1xf32> to vector<1x1x1xf32>
    %41 = vector.extract %40[0, 0, 0] : f32 from vector<1x1x1xf32>
    %42 = vector.broadcast %41 : f32 to vector<1x1xf32>
    %43 = arith.addf %35, %42 : vector<1x1xf32>
    %c0_18 = arith.constant 0 : index
    %c0_19 = arith.constant 0 : index
    %44 = vector.load %arg7[%c0_18, %c0_19] : memref<1x1xf32, #tpu.memory_space<vmem>>, vector<1x1xf32>
    tpu.vector_store %arg7[%c0_18, %c0_19], %43 {strides = array<i32>} : memref<1x1xf32, #tpu.memory_space<vmem>>, vector<1x1xf32>,
    %c0_i32_20 = arith.constant 0 : i32
    %45 = arith.cmpi eq, %arg1, %c0_i32_20 : i32
    %46 = arith.extui %45 : i1 to i32
    %c0_i32_21 = arith.constant 0 : i32
    %47 = arith.cmpi ne, %46, %c0_i32_21 : i32
    scf.if %47 {
      %48 = arith.index_cast %arg0 : i32 to index
      %49 = memref.load %arg2[%48] : memref<3xf32, #tpu.memory_space<smem>>
      %c0_22 = arith.constant 0 : index
      %c0_23 = arith.constant 0 : index
      %50 = vector.load %arg6[%c0_22, %c0_23] : memref<1x1xf32, #tpu.memory_space<vmem>>, vector<1x1xf32>
      %51 = vector.broadcast %49 : f32 to vector<1x1xf32>
      %52 = arith.mulf %51, %50 : vector<1x1xf32>
      %c0_24 = arith.constant 0 : index
      %c0_25 = arith.constant 0 : index
      %53 = vector.load %arg7[%c0_24, %c0_25] : memref<1x1xf32, #tpu.memory_space<vmem>>, vector<1x1xf32>
      %54 = arith.divf %52, %53 : vector<1x1xf32>
      %c0_26 = arith.constant 0 : index
      %c0_27 = arith.constant 0 : index
      %c0_28 = arith.constant 0 : index
      %55 = vector.load %arg5[%c0_26, %c0_27, %c0_28] : memref<1x1x1xf32, #tpu.memory_space<vmem>>, vector<1x1x1xf32>
      %56 = vector.shape_cast %55 : vector<1x1x1xf32> to vector<1x1xf32>
      %57 = vector.shape_cast %54 : vector<1x1xf32> to vector<1x1x1xf32>
      tpu.vector_store %arg5[%c0_26, %c0_27, %c0_28], %57 {strides = array<i32>} : memref<1x1x1xf32, #tpu.memory_space<vmem>>, vector<1x1x1xf32>,
    } else {
    }
    return
  }
  func.func @transform_0(%arg0: i32, %arg1: i32) -> i32 {
    %c0_i32 = arith.constant 0 : i32
    %c0_i32_0 = arith.constant 0 : i32
    return %c0_i32 : i32
  }
  func.func @transform_1(%arg0: i32, %arg1: i32) -> (i32, i32, i32) {
    %c0_i32 = arith.constant 0 : i32
    %c0_i32_0 = arith.constant 0 : i32
    return %arg0, %arg1, %c0_i32 : i32, i32, i32
  }
  func.func @transform_2(%arg0: i32, %arg1: i32) -> (i32, i32, i32) {
    %c0_i32 = arith.constant 0 : i32
    %c0_i32_0 = arith.constant 0 : i32
    return %arg0, %arg1, %c0_i32 : i32, i32, i32
  }
  func.func @transform_3(%arg0: i32, %arg1: i32) -> (i32, i32, i32) {
    %c0_i32 = arith.constant 0 : i32
    %c0_i32_0 = arith.constant 0 : i32
    %c0_i32_1 = arith.constant 0 : i32
    return %arg0, %c0_i32, %c0_i32_0 : i32, i32, i32
  }
}

</mosaic_0001>

<llo_original>
// kernel: _fused_weighted_ce.1
$region0: #{_fused_weighted_ce.1}
  #allocation0 [shape = 'u32[]', space=smem, size = 0x4, offset = 0x4, fixed_abs, tag = 'smem constant byte address 0x4 - core index']
  #allocation1 [shape = 'u32[72,128]{1,0:T(1,128)}', space=vmem, size = 0x9000, scoped, tag = 'internal scratch']
  #allocation2 [shape = 'f32[1,1]{1,0:T(1,128)}', space=vmem, size = 0x200, scoped, tag = 'scratch operand']
  #allocation3 [shape = 'f32[1,1]{1,0:T(1,128)}', space=vmem, size = 0x200, scoped, tag = 'scratch operand']
  %s0 = inlined_call_operand.vmem [shape: f32[3], index: 0, kind: input, shape index: {}]
  %s1 = inlined_call_operand.vmem [shape: f32[3,8,128], index: 1, kind: input, shape index: {}]
  %s2 = inlined_call_operand.vmem [shape: s32[3,8,1], index: 2, kind: input, shape index: {}]
  %s3 = inlined_call_operand.vmem [shape: f32[3,1,1], index: 3, kind: output, shape index: {}]
  %s4 = sld [smem:[#allocation0]]
  $region57: #{_fused_weighted_ce.1} parent=0
    _
  %s6 = ssub.s32 1, %s4
  %s7 = scalar_select 0, %s6, %s4
  $region1: #{_fused_weighted_ce.1} parent=0
    #allocation4 [shape = 'u8[512]{0}', space=smem, size = 0x200, scoped, tag = 'input window, operand 0, single buffered']
    #allocation5 [shape = 's32[2]{0}', space=sflag, size = 0x8, scoped, tag = 'scoped memory for _fused_weighted_ce.1']
    %8 = vsyncpa [#allocation5], 0
    loop: start=0, step=1, limit=5
    $region2: #{_fused_weighted_ce.1} parent=1 // loop_pre_header
      _
    $region3: #{_fused_weighted_ce.1} parent=1 // loop_header
      %s10 = sphi 0, %s14
      %p11 = scmp.ge.s32.totalorder %s10, 5
      %s17 = sphi 0, %s29
      %s18 = sphi 0, %s25
      %s19 = sphi 0, %s17
      %s20 = sphi 0, %s18
      %s21 = sphi 0, %s19
      %s22 = sphi 0, %s20
      %s30 = sphi 0, %s30
      %s32 = sphi 0, %s30
      %s33 = sphi 0, %s32
      %s47 = sphi 0, %s33
      %s55 = sphi 0, %s57
      %s58 = sphi 0, %s55
      %s59 = sphi 0, %s58
      %s75 = sphi 0, %s59
      %s83 = sphi 0, %s85
      %s86 = sphi 0, %s83
      %s87 = sphi 0, %s86
      %s103 = sphi 0, %s87
      %s109 = sphi 0, %s111
      %s112 = sphi 0, %s109
      %s113 = sphi 0, %s112
      %s129 = sphi 0, %s113
    $region4: #{_fused_weighted_ce.1} parent=1 // loop_header_branch
      %13 = sbr.rel (%p11) target = $region8
    $region5: #{_fused_weighted_ce.1} parent=1 // loop_body
      %s15 = ssub.s32 %s10, 1
      %s16 = ssub.s32 %s10, 2
      %s23 = sadd.s32 1, %s18
      %p24 = scmp.ge.s32.totalorder %s23, 1
      %s25 = scalar_select %p24, 0, %s23
      %s26 = sadd.s32 1, %s17
      %s27 = scalar_select %p24, %s26, %s17
      %p28 = scmp.ge.s32.totalorder %s27, 3
      %s29 = scalar_select %p28, 0, %s27
      %s31 = sadd.s32 %s30, 1
      %p34 = scmp.eq.s32.totalorder %s10, 2
      %p35 = scmp.ne.s32.totalorder %s30, %s32
      %p36 = scmp.eq.s32.totalorder %s10, 0
      %p37 = por %p35, %p36
      %p38 = scmp.ne.s32.totalorder %s30, %s32
      %p39 = scmp.eq.s32.totalorder %s15, 2
      %p40 = por %p38, %p39
      %p41 = scmp.ne.s32.totalorder %s32, %s33
      %p42 = scmp.eq.s32.totalorder %s15, 0
      %p43 = por %p41, %p42
      %p44 = scmp.ne.s32.totalorder %s32, %s33
      %p45 = scmp.eq.s32.totalorder %s16, 2
      %p46 = por %p44, %p45
      %p48 = scmp.ne.s32.totalorder %s33, %s47
      %p49 = scmp.eq.s32.totalorder %s16, 0
      %p50 = por %p48, %p49
      %s51 = ssub.s32 %s17, %s29
      %s52 = ssub.s32 %s18, %s25
      %s53 = sor.u32 %s51, %s52
      %p54 = scmp.eq.s32.totalorder %s53, 0
      %s56 = sadd.s32 %s55, 1
      %s57 = scalar_select %p54, %s55, %s56
      %p60 = pneg %p54
      %p61 = scmp.eq.s32.totalorder %s10, 2
      %p62 = por %p60, %p61
      %p63 = scmp.ne.s32.totalorder %s55, %s58
      %p64 = scmp.eq.s32.totalorder %s10, 0
      %p65 = por %p63, %p64
      %p66 = scmp.ne.s32.totalorder %s55, %s58
      %p67 = scmp.eq.s32.totalorder %s15, 2
      %p68 = por %p66, %p67
      %p69 = scmp.ne.s32.totalorder %s58, %s59
      %p70 = scmp.eq.s32.totalorder %s15, 0
      %p71 = por %p69, %p70
      %p72 = scmp.ne.s32.totalorder %s58, %s59
      %p73 = scmp.eq.s32.totalorder %s16, 2
      %p74 = por %p72, %p73
      %p76 = scmp.ne.s32.totalorder %s59, %s75
      %p77 = scmp.eq.s32.totalorder %s16, 0
      %p78 = por %p76, %p77
      %s79 = ssub.s32 %s17, %s29
      %s80 = ssub.s32 %s18, %s25
      %s81 = sor.u32 %s79, %s80
      %p82 = scmp.eq.s32.totalorder %s81, 0
      %s84 = sadd.s32 %s83, 1
      %s85 = scalar_select %p82, %s83, %s84
      %p88 = pneg %p82
      %p89 = scmp.eq.s32.totalorder %s10, 2
      %p90 = por %p88, %p89
      %p91 = scmp.ne.s32.totalorder %s83, %s86
      %p92 = scmp.eq.s32.totalorder %s10, 0
      %p93 = por %p91, %p92
      %p94 = scmp.ne.s32.totalorder %s83, %s86
      %p95 = scmp.eq.s32.totalorder %s15, 2
      %p96 = por %p94, %p95
      %p97 = scmp.ne.s32.totalorder %s86, %s87
      %p98 = scmp.eq.s32.totalorder %s15, 0
      %p99 = por %p97, %p98
      %p100 = scmp.ne.s32.totalorder %s86, %s87
      %p101 = scmp.eq.s32.totalorder %s16, 2
      %p102 = por %p100, %p101
      %p104 = scmp.ne.s32.totalorder %s87, %s103
      %p105 = scmp.eq.s32.totalorder %s16, 0
      %p106 = por %p104, %p105
      %s107 = ssub.s32 %s17, %s29
      %p108 = scmp.eq.s32.totalorder %s107, 0
      %s110 = sadd.s32 %s109, 1
      %s111 = scalar_select %p108, %s109, %s110
      %p114 = pneg %p108
      %p115 = scmp.eq.s32.totalorder %s10, 2
      %p116 = por %p114, %p115
      %p117 = scmp.ne.s32.totalorder %s109, %s112
      %p118 = scmp.eq.s32.totalorder %s10, 0
      %p119 = por %p117, %p118
      %p120 = scmp.ne.s32.totalorder %s109, %s112
      %p121 = scmp.eq.s32.totalorder %s15, 2
      %p122 = por %p120, %p121
      %p123 = scmp.ne.s32.totalorder %s112, %s113
      %p124 = scmp.eq.s32.totalorder %s15, 0
      %p125 = por %p123, %p124
      %p126 = scmp.ne.s32.totalorder %s112, %s113
      %p127 = scmp.eq.s32.totalorder %s16, 2
      %p128 = por %p126, %p127
      %p130 = scmp.ne.s32.totalorder %s113, %s129
      %p131 = scmp.eq.s32.totalorder %s16, 0
      %p132 = por %p130, %p131
      %p133 = scmp.le.s32.totalorder 1, %s10
      %p134 = scmp.lt.s32.totalorder %s10, 4
      %p135 = pnand %p133, %p134
      %p136 = pneg %p135
      // Predicated region
      $region9: #{_fused_weighted_ce.1} parent=5 // pred_check
        _
      $region10: #{_fused_weighted_ce.1} parent=5 // pred_check_branch
        %138 = sbr.rel (%p135) target = $region12
      $region11: #{_fused_weighted_ce.1} parent=5 // pred_region
        %s139 = ssub.s32 %s10, 1
        // Predicated region
        $region13: #{_fused_weighted_ce.1} parent=11 // pred_check
          %p140 = pneg %p43
        $region14: #{_fused_weighted_ce.1} parent=11 // pred_check_branch
          %142 = sbr.rel (%p140) target = $region16
        $region15: #{_fused_weighted_ce.1} parent=11 // pred_region
          %144 = vsyncadd [#allocation5], 0
          %s146 = sshll.u32 %s0, 4
          %s147 = int_to_ptr.vmem [resolvable:$true] %s146
          %149 = dma.vmem_to_smem %s147, 16, [#allocation4], [#allocation5]
        $region16: #{_fused_weighted_ce.1} parent=11 // pred_fallthru
          _
      $region12: #{_fused_weighted_ce.1} parent=5 // pred_fallthru
        _
      %p150 = scmp.lt.s32.totalorder %s10, 3
      // Predicated region
      $region17: #{_fused_weighted_ce.1} parent=5 // pred_check
        %p151 = pneg %p150
      $region18: #{_fused_weighted_ce.1} parent=5 // pred_check_branch
        %153 = sbr.rel (%p151) target = $region20
      $region19: #{_fused_weighted_ce.1} parent=5 // pred_region
        // Predicated region
        $region21: #{_fused_weighted_ce.1} parent=19 // pred_check
          %p154 = pneg %p65
        $region22: #{_fused_weighted_ce.1} parent=19 // pred_check_branch
          %156 = sbr.rel (%p154) target = $region24
        $region23: #{_fused_weighted_ce.1} parent=19 // pred_region
          %p157 = scmp.lt.s32.totalorder %s17, 2
          %s158 = scalar_select %p157, %s17, 2
          %p159 = scmp.lt.s32.totalorder %s18, 0
          %s160 = scalar_select %p159, %s18, 0
          %s161 = sadd.s32 %s160, %s158
          %s162 = smul.addr %s161, 8
          %s163 = scalar_lea.vmem %s1, %s162
        $region24: #{_fused_weighted_ce.1} parent=19 // pred_fallthru
          _
        // Predicated region
        $region25: #{_fused_weighted_ce.1} parent=19 // pred_check
          %p164 = pneg %p93
        $region26: #{_fused_weighted_ce.1} parent=19 // pred_check_branch
          %166 = sbr.rel (%p164) target = $region28
        $region27: #{_fused_weighted_ce.1} parent=19 // pred_region
          %p167 = scmp.lt.s32.totalorder %s17, 2
          %s168 = scalar_select %p167, %s17, 2
          %p169 = scmp.lt.s32.totalorder %s18, 0
          %s170 = scalar_select %p169, %s18, 0
          %s171 = sadd.s32 %s170, %s168
          %s172 = smul.addr %s171, 8
          %s173 = scalar_lea.vmem %s2, %s172
        $region28: #{_fused_weighted_ce.1} parent=19 // pred_fallthru
          _
      $region20: #{_fused_weighted_ce.1} parent=5 // pred_fallthru
        _
      %p174 = scmp.le.s32.totalorder 1, %s10
      %p175 = scmp.lt.s32.totalorder %s10, 4
      %p176 = pnand %p174, %p175
      %p177 = pneg %p176
      // Predicated region
      $region29: #{_fused_weighted_ce.1} parent=5 // pred_check
        _
      $region30: #{_fused_weighted_ce.1} parent=5 // pred_check_branch
        %179 = sbr.rel (%p176) target = $region32
      $region31: #{_fused_weighted_ce.1} parent=5 // pred_region
        %s180 = ssub.s32 %s10, 1
        // Predicated region
        $region33: #{_fused_weighted_ce.1} parent=31 // pred_check
          %p181 = pneg %p43
        $region34: #{_fused_weighted_ce.1} parent=31 // pred_check_branch
          %183 = sbr.rel (%p181) target = $region36
        $region35: #{_fused_weighted_ce.1} parent=31 // pred_region
          %185 = dma.done [#allocation5], 16
        $region36: #{_fused_weighted_ce.1} parent=31 // pred_fallthru
          _
        %186 = sfence
        %p187 = pneg %p43
        %p188 = pneg %p40
        %p189 = scmp.lt.s32.totalorder %s19, 2
        %s190 = scalar_select %p189, %s19, 2
        %p191 = scmp.lt.s32.totalorder %s20, 0
        %s192 = scalar_select %p191, %s20, 0
        %s193 = sadd.s32 %s192, %s190
        %s194 = smul.addr %s193, 8
        %s195 = scalar_lea.vmem %s1, %s194
        %p196 = pneg %p71
        %p197 = pneg %p68
        %p198 = scmp.lt.s32.totalorder %s19, 2
        %s199 = scalar_select %p198, %s19, 2
        %p200 = scmp.lt.s32.totalorder %s20, 0
        %s201 = scalar_select %p200, %s20, 0
        %s202 = sadd.s32 %s201, %s199
        %s203 = smul.addr %s202, 8
        %s204 = scalar_lea.vmem %s2, %s203
        %p205 = pneg %p99
        %p206 = pneg %p96
        %p207 = pneg %p125
        %p208 = pneg %p122
        %p209 = scmp.lt.s32.totalorder %s19, 2
        %s210 = scalar_select %p209, %s19, 2
        %s211 = scalar_lea.vmem %s3, %s210
        %p212 = scmp.lt.s32.totalorder %s19, 2
        %s213 = scalar_select %p212, %s19, 2
        %p214 = scmp.lt.s32.totalorder %s20, 0
        %s215 = scalar_select %p214, %s20, 0
        %s216 = sadd.s32 %s215, %s213
        %s217 = smul.addr %s216, 8
        %s218 = scalar_lea.vmem %s1, %s217
        %p219 = scmp.lt.s32.totalorder %s19, 2
        %s220 = scalar_select %p219, %s19, 2
        %p221 = scmp.lt.s32.totalorder %s20, 0
        %s222 = scalar_select %p221, %s20, 0
        %s223 = sadd.s32 %s222, %s220
        %s224 = smul.addr %s223, 8
        %s225 = scalar_lea.vmem %s2, %s224
        %p226 = scmp.lt.s32.totalorder %s19, 2
        %s227 = scalar_select %p226, %s19, 2
        %s228 = scalar_lea.vmem %s3, %s227
        %p229 = scmp.eq.s32.totalorder %s20, 0
        // Predicated region
        $region37: #{_fused_weighted_ce.1} parent=31 // pred_check
          %p230 = pneg %p229
        $region38: #{_fused_weighted_ce.1} parent=31 // pred_check_branch
          %232 = sbr.rel (%p230) target = $region40
        $region39: #{_fused_weighted_ce.1} parent=31 // pred_region
          %vm233 = vcmask 0
          %234 = vst.msk [vmem:[#allocation2] sm:$0x1] %vm233, 0.0
          %235 = vst.msk [vmem:[#allocation3] sm:$0x1] %vm233, 0.0
        $region40: #{_fused_weighted_ce.1} parent=31 // pred_fallthru
          _
        %v236 = vld [vmem:[%s218] sm:$0xff]
        %v237 = vld [vmem:[%s225] sm:$0xff]
        %238 = vmax.xlane.f32.xlu0 %v236
        %v239 = vpop.xlane.xlu0 %238
        %v240 = vsub.f32 %v236, %v239
        %v241 = vmul.f32 %v240, 1.442695
        %v242 = vpow.pop %v241
        %243 = vadd.xlane.f32.xlu0 %v242
        %v244 = vpop.xlane.xlu0 %243
        %v245 = vlog2.pop %v244
        %v246 = vmul.f32 %v245, 0.6931472
        %v247 = vlaneseq
        %v248 = vand.u32 %v247, 127
        %249 = vset.pattern.permute.xlu0 0
        %250 = vperm.xlu0 %249, %v237
        %v251 = vpop.permute.xlu0 %250
        %vm252 = vcmp.eq.s32.totalorder %v248, %v251
        %v253 = vsel %vm252, %v240, 0.0
        %254 = vadd.xlane.f32.xlu0 %v253
        %v255 = vpop.xlane.xlu0 %254
        %v256 = vsub.f32 %v246, %v255
        %vm257 = vcmp.ne.s32.totalorder %v237, 4294967295
        %v258 = vld [vmem:[#allocation2] sm:$0x1]
        %v259 = vsel %vm257, %v256, 0.0
        %vm260 = vcmask 7168
        %v261 = vsel %vm260, %v259, 0.0
        %262 = vadd.xlane.f32.xlu0 %v261
        %v263 = vpop.xlane.xlu0 %262
        %v264 = vrot.slane %v263, 4
        %v265 = vadd.f32 %v263, %v264
        %v266 = vrot.slane %v265, 2
        %v267 = vadd.f32 %v265, %v266
        %v268 = vrot.slane %v267, 1
        %v269 = vadd.f32 %v267, %v268
        %s270 = vtos %v269
        %v271 = vstv %s270
        %v272 = vadd.f32 %v258, %v271
        %vm273 = vcmask 0
        %274 = vst.msk [vmem:[#allocation2] sm:$0x1] %vm273, %v272
        %v275 = vld [vmem:[#allocation3] sm:$0x1]
        %v276 = vsel %vm257, 1, 0
        %v277 = vcvt.s32.f32 %v276
        %v278 = vsel %vm260, %v277, 0.0
        %279 = vadd.xlane.f32.xlu0 %v278
        %v280 = vpop.xlane.xlu0 %279
        %v281 = vrot.slane %v280, 4
        %v282 = vadd.f32 %v280, %v281
        %v283 = vrot.slane %v282, 2
        %v284 = vadd.f32 %v282, %v283
        %v285 = vrot.slane %v284, 1
        %v286 = vadd.f32 %v284, %v285
        %s287 = vtos %v286
        %v288 = vstv %s287
        %v289 = vadd.f32 %v275, %v288
        %290 = vst.msk [vmem:[#allocation3] sm:$0x1] %vm273, %v289
        // Predicated region
        $region41: #{_fused_weighted_ce.1} parent=31 // pred_check
          %p291 = pneg %p229
        $region42: #{_fused_weighted_ce.1} parent=31 // pred_check_branch
          %293 = sbr.rel (%p291) target = $region44
        $region43: #{_fused_weighted_ce.1} parent=31 // pred_region
          %s294 = sld [smem:[#allocation4 + %s19]]
          %v295 = vld [vmem:[#allocation2] sm:$0x1]
          %v296 = vstv %s294
          %v297 = vmul.f32 %v296, %v295
          %v298 = vld [vmem:[#allocation3] sm:$0x1]
          %v299 = vrcp.pop %v298
          %v300 = vmul.f32 %v298, %v299
          %v301 = vsub.f32 1.0, %v300
          %v302 = vmul.f32 %v299, %v301
          %v303 = vadd.f32 %v299, %v302
          %vm304 = vweird.f32 %v298
          %vm305 = vweird.f32 %v299
          %vm306 = vmor %vm304, %vm305
          %v307 = vsel %vm306, %v299, %v303
          %v308 = vand.u32 2147483647, %v298
          %vm309 = vcmp.eq.f32.partialorder %v308, 8.507059e+37
          %v310 = vand.u32 %v298, 2147483648
          %v311 = vor.u32 1.1754944e-38, %v310
          %v312 = vsel %vm309, %v311, %v307
          %v313 = vmul.f32 %v297, %v312
          %314 = vst.msk [vmem:[%s228] sm:$0x1] %vm273, %v313
        $region44: #{_fused_weighted_ce.1} parent=31 // pred_fallthru
          _
        %p315 = scmp.lt.s32.totalorder %s19, 2
        %s316 = scalar_select %p315, %s19, 2
        %s317 = scalar_lea.vmem %s3, %s316
        // Predicated region
        $region45: #{_fused_weighted_ce.1} parent=31 // pred_check
          %p318 = pneg %p122
        $region46: #{_fused_weighted_ce.1} parent=31 // pred_check_branch
          %320 = sbr.rel (%p318) target = $region48
        $region47: #{_fused_weighted_ce.1} parent=31 // pred_region
          _
        $region48: #{_fused_weighted_ce.1} parent=31 // pred_fallthru
          _
      $region32: #{_fused_weighted_ce.1} parent=5 // pred_fallthru
        _
      %p321 = scmp.le.s32.totalorder 2, %s10
      // Predicated region
      $region49: #{_fused_weighted_ce.1} parent=5 // pred_check
        %p322 = pneg %p321
      $region50: #{_fused_weighted_ce.1} parent=5 // pred_check_branch
        %324 = sbr.rel (%p322) target = $region52
      $region51: #{_fused_weighted_ce.1} parent=5 // pred_region
        %s325 = ssub.s32 %s10, 2
        // Predicated region
        $region53: #{_fused_weighted_ce.1} parent=51 // pred_check
          %p326 = pneg %p128
        $region54: #{_fused_weighted_ce.1} parent=51 // pred_check_branch
          %328 = sbr.rel (%p326) target = $region56
        $region55: #{_fused_weighted_ce.1} parent=51 // pred_region
          %p329 = scmp.lt.s32.totalorder %s21, 2
          %s330 = scalar_select %p329, %s21, 2
          %s331 = scalar_lea.vmem %s3, %s330
        $region56: #{_fused_weighted_ce.1} parent=51 // pred_fallthru
          _
      $region52: #{_fused_weighted_ce.1} parent=5 // pred_fallthru
        _
    $region6: #{_fused_weighted_ce.1} parent=1 // loop_footer
      %s14 = sadd.s32 1, %s10
    $region7: #{_fused_weighted_ce.1} parent=1 // loop_footer_branch
      %9 = sbr.rel target = $region3
    $region8: #{_fused_weighted_ce.1} parent=1 // loop_exit
      _
    %332 = vsyncpa [#allocation5], 1
    %s333 = scalar_lea.sflag [#allocation5], 1
    %334 = vsyncpa %s333, 1

</llo_original>
